<compile_context>
chip_gen: v5e
topology: v5e:2x2
jax: 0.10.0
libtpu: 0.0.40
codegen_flags: <defaults>
</compile_context>

<pallas_src>
import functools

import jax
import jax.numpy as jnp
from jax.experimental import pallas as pl
from jax.experimental.pallas import tpu as pltpu


def _round_up(x, m):
    return (x + m - 1) // m * m


# ----------------------------------------------------------------------------
# Kernels
# ----------------------------------------------------------------------------
def _classifier_eval_kernel(x_ref, w_ref, b_ref, o_ref):
    """Eval mode: Dropout(0.5) is identity.  out = relu(x) @ W + b."""
    x = jnp.maximum(x_ref[...], 0.0)                                   # ReLU (VPU)
    acc = jnp.dot(x, w_ref[...], preferred_element_type=jnp.float32)   # MXU
    o_ref[...] = (acc + b_ref[...]).astype(o_ref.dtype)


def _classifier_train_kernel(x_ref, m_ref, w_ref, b_ref, o_ref):
    """Train mode: m_ref holds the dropout keep-mask pre-scaled by 1/(1-p)=2."""
    x = jnp.maximum(x_ref[...], 0.0) * m_ref[...]                      # ReLU + dropout
    acc = jnp.dot(x, w_ref[...], preferred_element_type=jnp.float32)   # MXU
    o_ref[...] = (acc + b_ref[...]).astype(o_ref.dtype)


# ----------------------------------------------------------------------------
# Wrapper
# ----------------------------------------------------------------------------
@functools.partial(jax.jit, static_argnames=("training", "tile_b"))
def classifier_forward(feat, weight_t, bias, key, *, training=False, tile_b=1024):
    """feat: [B, 512] f32, weight_t: [512, C] f32, bias: [1, C] (or [C]) f32.

    `key` is a jax.random key used only when training=True (dropout mask).
    """
    B, D = feat.shape
    C = weight_t.shape[1]

    # Lane-dense class dim: pad C up to a multiple of 128.
    C_pad = _round_up(max(C, 128), 128)
    # Batch tiling: TB rows per grid step (<=1024 keeps VMEM use tiny on v7x).
    TB = min(tile_b, _round_up(B, 8))
    B_pad = _round_up(B, TB)
    grid = (B_pad // TB,)

    if B_pad != B:
        feat = jnp.pad(feat, ((0, B_pad - B), (0, 0)))
    w = weight_t if C_pad == C else jnp.pad(weight_t, ((0, 0), (0, C_pad - C)))
    b2 = bias.reshape(1, C)
    if C_pad != C:
        b2 = jnp.pad(b2, ((0, 0), (0, C_pad - C)))

    feat_spec = pl.BlockSpec((TB, D), lambda i: (i, 0))
    w_spec = pl.BlockSpec((D, C_pad), lambda i: (0, 0))      # resident across grid
    b_spec = pl.BlockSpec((1, C_pad), lambda i: (0, 0))      # resident across grid
    out_spec = pl.BlockSpec((TB, C_pad), lambda i: (i, 0))
    out_shape = jax.ShapeDtypeStruct((B_pad, C_pad), jnp.float32)
    cparams = pltpu.CompilerParams(dimension_semantics=("parallel",))

    if training:
        # TODO(synk): on-chip pltpu.prng_seed/prng_random_bits has no
        # CPU/interpret lowering, so the keep-mask is drawn with jax.random
        # outside the kernel and streamed in (pre-scaled by 1/(1-p)).
        keep = jax.random.bernoulli(key, 0.5, (B_pad, D))
        scale = keep.astype(feat.dtype) * 2.0
        out = pl.pallas_call(
            _classifier_train_kernel,
            out_shape=out_shape,
            grid=grid,
            in_specs=[feat_spec, feat_spec, w_spec, b_spec],
            out_specs=out_spec,
            compiler_params=cparams,
        )(feat, scale, w, b2)
    else:
        out = pl.pallas_call(
            _classifier_eval_kernel,
            out_shape=out_shape,
            grid=grid,
            in_specs=[feat_spec, w_spec, b_spec],
            out_specs=out_spec,
            compiler_params=cparams,
        )(feat, w, b2)

    return out[:B, :C]


# ----------------------------------------------------------------------------
# Deterministic parameter init (matches nn.Linear(512, num_classes) shapes;
# kaiming-uniform-style bounds: U(-1/sqrt(512), 1/sqrt(512)) )
# ----------------------------------------------------------------------------
def init_params(key, in_features=512, num_classes=10):
    kw, kb = jax.random.split(key)
    bound = 1.0 / jnp.sqrt(jnp.float32(in_features))
    # PyTorch stores weight as [out, in]; we keep the transposed [in, out] layout.
    weight_t = jax.random.uniform(
        kw, (in_features, num_classes), jnp.float32, -bound, bound)
    bias = jax.random.uniform(
        kb, (1, num_classes), jnp.float32, -bound, bound)
    return weight_t, bias


if __name__ == "__main__":
    key = jax.random.PRNGKey(0)
    k_feat, k_param, k_drop = jax.random.split(key, 3)

    B, D, NUM_CLASSES = 8, 512, 10
    feat = jax.random.normal(k_feat, (B, D), jnp.float32)
    weight_t, bias = init_params(k_param, D, NUM_CLASSES)

    # --- Eval mode (Dropout is identity) vs pure-JAX reference -------------
    out_eval = classifier_forward(feat, weight_t, bias, k_drop, training=False)
    out_eval = jax.block_until_ready(out_eval)
    ref_eval = jnp.maximum(feat, 0.0) @ weight_t + bias
    assert out_eval.shape == (B, NUM_CLASSES)
    assert jnp.allclose(out_eval, ref_eval, atol=1e-5, rtol=1e-5), "eval mismatch"

    # --- Train mode (Dropout p=0.5, mask reproducible from k_drop) ---------
    out_train = classifier_forward(feat, weight_t, bias, k_drop, training=True)
    out_train = jax.block_until_ready(out_train)
    keep = jax.random.bernoulli(k_drop, 0.5, (B, D)).astype(jnp.float32) * 2.0
    ref_train = (jnp.maximum(feat, 0.0) * keep) @ weight_t + bias
    assert out_train.shape == (B, NUM_CLASSES)
    assert jnp.allclose(out_train, ref_train, atol=1e-5, rtol=1e-5), "train mismatch"

    print("KERNEL_OK")
</pallas_src>

<mosaic_0001>
module attributes {stable_mosaic.version = 11 : i64} {
  func.func @_classifier_eval_kernel(%arg0: i32, %arg1: memref<8x512xf32, #tpu.memory_space<vmem>>, %arg2: memref<512x128xf32, #tpu.memory_space<vmem>>, %arg3: memref<1x128xf32, #tpu.memory_space<vmem>>, %arg4: memref<8x128xf32, #tpu.memory_space<vmem>>) attributes {dimension_semantics = [#tpu.dimension_semantics<parallel>], iteration_bounds = array<i64: 1>, scalar_prefetch = 0 : i64, scratch_operands = 0 : i64, tpu.core_type = #tpu.core_type<tc>, window_params = [{transform_indices = @transform_0, window_bounds = array<i64: 8, 512>}, {pipeline_mode = #tpu.pipeline_mode<synchronous>, transform_indices = @transform_1, window_bounds = array<i64: 512, 128>}, {pipeline_mode = #tpu.pipeline_mode<synchronous>, transform_indices = @transform_2, window_bounds = array<i64: 1, 128>}, {transform_indices = @transform_3, window_bounds = array<i64: 8, 128>}]} {
    %c0 = arith.constant 0 : index
    %c0_0 = arith.constant 0 : index
    %0 = vector.load %arg1[%c0, %c0_0] : memref<8x512xf32, #tpu.memory_space<vmem>>, vector<8x512xf32>
    %cst = arith.constant 0.000000e+00 : f32
    %1 = vector.broadcast %cst : f32 to vector<8x512xf32>
    %2 = arith.maximumf %0, %1 : vector<8x512xf32>
    %c0_1 = arith.constant 0 : index
    %c0_2 = arith.constant 0 : index
    %3 = vector.load %arg2[%c0_1, %c0_2] : memref<512x128xf32, #tpu.memory_space<vmem>>, vector<512x128xf32>
    %cst_3 = arith.constant dense<0.000000e+00> : vector<8x128xf32>
    %4 = tpu.matmul %2, %3, %cst_3 {dimension_numbers = #tpu.dot_dimension_numbers<[1], [0], [0], [1], [0, 0, 1, 1], [], []>} : vector<8x512xf32>, vector<512x128xf32>, vector<8x128xf32> -> vector<8x128xf32>
    %c0_4 = arith.constant 0 : index
    %c0_5 = arith.constant 0 : index
    %5 = vector.load %arg3[%c0_4, %c0_5] : memref<1x128xf32, #tpu.memory_space<vmem>>, vector<1x128xf32>
    %6 = vector.broadcast %5 : vector<1x128xf32> to vector<8x128xf32>
    %7 = arith.addf %4, %6 : vector<8x128xf32>
    %c0_6 = arith.constant 0 : index
    %c0_7 = arith.constant 0 : index
    %8 = vector.load %arg4[%c0_6, %c0_7] : memref<8x128xf32, #tpu.memory_space<vmem>>, vector<8x128xf32>
    tpu.vector_store %arg4[%c0_6, %c0_7], %7 {strides = array<i32>} : memref<8x128xf32, #tpu.memory_space<vmem>>, vector<8x128xf32>,
    return
  }
  func.func @transform_0(%arg0: i32) -> (i32, i32) {
    %c0_i32 = arith.constant 0 : i32
    %c0_i32_0 = arith.constant 0 : i32
    return %arg0, %c0_i32 : i32, i32
  }
  func.func @transform_1(%arg0: i32) -> (i32, i32) {
    %c0_i32 = arith.constant 0 : i32
    %c0_i32_0 = arith.constant 0 : i32
    %c0_i32_1 = arith.constant 0 : i32
    return %c0_i32, %c0_i32_0 : i32, i32
  }
  func.func @transform_2(%arg0: i32) -> (i32, i32) {
    %c0_i32 = arith.constant 0 : i32
    %c0_i32_0 = arith.constant 0 : i32
    %c0_i32_1 = arith.constant 0 : i32
    return %c0_i32, %c0_i32_0 : i32, i32
  }
  func.func @transform_3(%arg0: i32) -> (i32, i32) {
    %c0_i32 = arith.constant 0 : i32
    %c0_i32_0 = arith.constant 0 : i32
    return %arg0, %c0_i32 : i32, i32
  }
}

</mosaic_0001>

<llo_original>
// kernel: classifier_forward.1
$region0: #{classifier_forward.1}
  #allocation0 [shape = 'u32[]', space=smem, size = 0x4, offset = 0x4, fixed_abs, tag = 'smem constant byte address 0x4 - core index']
  #allocation1 [shape = 'u32[72,128]{1,0:T(1,128)}', space=vmem, size = 0x9000, scoped, tag = 'internal scratch']
  %s0 = inlined_call_operand.vmem [shape: f32[8,512], index: 0, kind: input, shape index: {}]
  %s1 = inlined_call_operand.vmem [shape: f32[512,128], index: 1, kind: input, shape index: {}]
  %s2 = inlined_call_operand.vmem [shape: f32[1,128], index: 2, kind: input, shape index: {}]
  %s3 = inlined_call_operand.hbm [shape: f32[8,128], index: 3, kind: output, shape index: {}]
  %s4 = sld [smem:[#allocation0]]
  $region22: #{classifier_forward.1} parent=0
    _
  %s6 = ssub.s32 1, %s4
  %s7 = scalar_select 0, %s6, %s4
  $region1: #{classifier_forward.1} parent=0
    #allocation2 [shape = 'u8[4096]{0}', space=vmem, size = 0x1000, scoped, tag = 'output window, operand 0, single buffered']
    #allocation3 [shape = 's32[1]{0}', space=sflag, size = 0x4, scoped, tag = 'scoped memory for classifier_forward.1']
    %8 = vsyncpa [#allocation3], 0
    // Predicated region
    $region2: #{classifier_forward.1} parent=1 // pred_check
      _
    $region3: #{classifier_forward.1} parent=1 // pred_check_branch
      %10 = sbr.rel (0) target = $region5
    $region4: #{classifier_forward.1} parent=1 // pred_region
      _
    $region5: #{classifier_forward.1} parent=1 // pred_fallthru
      _
    // Predicated region
    $region6: #{classifier_forward.1} parent=1 // pred_check
      _
    $region7: #{classifier_forward.1} parent=1 // pred_check_branch
      %12 = sbr.rel (0) target = $region9
    $region8: #{classifier_forward.1} parent=1 // pred_region
      _
    $region9: #{classifier_forward.1} parent=1 // pred_fallthru
      _
    // Predicated region
    $region10: #{classifier_forward.1} parent=1 // pred_check
      _
    $region11: #{classifier_forward.1} parent=1 // pred_check_branch
      %14 = sbr.rel (0) target = $region13
    $region12: #{classifier_forward.1} parent=1 // pred_region
      _
    $region13: #{classifier_forward.1} parent=1 // pred_fallthru
      _
    %v15 = vld [vmem:[%s0] sm:$0xff]
    %v16 = vld [vmem:[%s0 + $0x8] sm:$0xff]
    %v17 = vld [vmem:[%s0 + $0x10] sm:$0xff]
    %v18 = vld [vmem:[%s0 + $0x18] sm:$0xff]
    %v19 = vmax.f32 %v15, 0.0
    %v20 = vmax.f32 %v16, 0.0
    %v21 = vmax.f32 %v17, 0.0
    %v22 = vmax.f32 %v18, 0.0
    %v23 = vld [vmem:[%s1] sm:$0xff]
    %v24 = vld [vmem:[%s1 + $0x8] sm:$0xff]
    %v25 = vld [vmem:[%s1 + $0x10] sm:$0xff]
    %v26 = vld [vmem:[%s1 + $0x18] sm:$0xff]
    %v27 = vld [vmem:[%s1 + $0x20] sm:$0xff]
    %v28 = vld [vmem:[%s1 + $0x28] sm:$0xff]
    %v29 = vld [vmem:[%s1 + $0x30] sm:$0xff]
    %v30 = vld [vmem:[%s1 + $0x38] sm:$0xff]
    %v31 = vld [vmem:[%s1 + $0x40] sm:$0xff]
    %v32 = vld [vmem:[%s1 + $0x48] sm:$0xff]
    %v33 = vld [vmem:[%s1 + $0x50] sm:$0xff]
    %v34 = vld [vmem:[%s1 + $0x58] sm:$0xff]
    %v35 = vld [vmem:[%s1 + $0x60] sm:$0xff]
    %v36 = vld [vmem:[%s1 + $0x68] sm:$0xff]
    %v37 = vld [vmem:[%s1 + $0x70] sm:$0xff]
    %v38 = vld [vmem:[%s1 + $0x78] sm:$0xff]
    %v39 = vld [vmem:[%s1 + $0x80] sm:$0xff]
    %v40 = vld [vmem:[%s1 + $0x88] sm:$0xff]
    %v41 = vld [vmem:[%s1 + $0x90] sm:$0xff]
    %v42 = vld [vmem:[%s1 + $0x98] sm:$0xff]
    %v43 = vld [vmem:[%s1 + $0xa0] sm:$0xff]
    %v44 = vld [vmem:[%s1 + $0xa8] sm:$0xff]
    %v45 = vld [vmem:[%s1 + $0xb0] sm:$0xff]
    %v46 = vld [vmem:[%s1 + $0xb8] sm:$0xff]
    %v47 = vld [vmem:[%s1 + $0xc0] sm:$0xff]
    %v48 = vld [vmem:[%s1 + $0xc8] sm:$0xff]
    %v49 = vld [vmem:[%s1 + $0xd0] sm:$0xff]
    %v50 = vld [vmem:[%s1 + $0xd8] sm:$0xff]
    %v51 = vld [vmem:[%s1 + $0xe0] sm:$0xff]
    %v52 = vld [vmem:[%s1 + $0xe8] sm:$0xff]
    %v53 = vld [vmem:[%s1 + $0xf0] sm:$0xff]
    %v54 = vld [vmem:[%s1 + $0xf8] sm:$0xff]
    %v55 = vld [vmem:[%s1 + $0x100] sm:$0xff]
    %v56 = vld [vmem:[%s1 + $0x108] sm:$0xff]
    %v57 = vld [vmem:[%s1 + $0x110] sm:$0xff]
    %v58 = vld [vmem:[%s1 + $0x118] sm:$0xff]
    %v59 = vld [vmem:[%s1 + $0x120] sm:$0xff]
    %v60 = vld [vmem:[%s1 + $0x128] sm:$0xff]
    %v61 = vld [vmem:[%s1 + $0x130] sm:$0xff]
    %v62 = vld [vmem:[%s1 + $0x138] sm:$0xff]
    %v63 = vld [vmem:[%s1 + $0x140] sm:$0xff]
    %v64 = vld [vmem:[%s1 + $0x148] sm:$0xff]
    %v65 = vld [vmem:[%s1 + $0x150] sm:$0xff]
    %v66 = vld [vmem:[%s1 + $0x158] sm:$0xff]
    %v67 = vld [vmem:[%s1 + $0x160] sm:$0xff]
    %v68 = vld [vmem:[%s1 + $0x168] sm:$0xff]
    %v69 = vld [vmem:[%s1 + $0x170] sm:$0xff]
    %v70 = vld [vmem:[%s1 + $0x178] sm:$0xff]
    %v71 = vld [vmem:[%s1 + $0x180] sm:$0xff]
    %v72 = vld [vmem:[%s1 + $0x188] sm:$0xff]
    %v73 = vld [vmem:[%s1 + $0x190] sm:$0xff]
    %v74 = vld [vmem:[%s1 + $0x198] sm:$0xff]
    %v75 = vld [vmem:[%s1 + $0x1a0] sm:$0xff]
    %v76 = vld [vmem:[%s1 + $0x1a8] sm:$0xff]
    %v77 = vld [vmem:[%s1 + $0x1b0] sm:$0xff]
    %v78 = vld [vmem:[%s1 + $0x1b8] sm:$0xff]
    %v79 = vld [vmem:[%s1 + $0x1c0] sm:$0xff]
    %v80 = vld [vmem:[%s1 + $0x1c8] sm:$0xff]
    %v81 = vld [vmem:[%s1 + $0x1d0] sm:$0xff]
    %v82 = vld [vmem:[%s1 + $0x1d8] sm:$0xff]
    %v83 = vld [vmem:[%s1 + $0x1e0] sm:$0xff]
    %v84 = vld [vmem:[%s1 + $0x1e8] sm:$0xff]
    %v85 = vld [vmem:[%s1 + $0x1f0] sm:$0xff]
    %v86 = vld [vmem:[%s1 + $0x1f8] sm:$0xff]
    %v87 = vld [vmem:[%s2] sm:$0x1]
    %v89 = vperm.slane %v87, 0
    %91 = vmatpush.msra.mxu0 %v38
    %92 = vmatpush.msra.mxu0 %v37
    %93 = vmatpush.msra.mxu0 %v36
    %94 = vmatpush.msra.mxu0 %v35
    %95 = vmatpush.msra.mxu0 %v34
    %96 = vmatpush.msra.mxu0 %v33
    %97 = vmatpush.msra.mxu0 %v32
    %98 = vmatpush.msra.mxu0 %v31
    %99 = vmatpush.msra.mxu0 %v30
    %100 = vmatpush.msra.mxu0 %v29
    %101 = vmatpush.msra.mxu0 %v28
    %102 = vmatpush.msra.mxu0 %v27
    %103 = vmatpush.msra.mxu0 %v26
    %104 = vmatpush.msra.mxu0 %v25
    %105 = vmatpush.msra.mxu0 %v24
    %106 = vmatpush.msra.mxu0 %v23
    %107 = vmatmul.f32.gmra.mxu0 %v19
    %v108 = vpop.f32.mrf.mxu0
    %v109 = vadd.f32 %v89, %v108
    %110 = vdwg.mxu0
    %111 = vmatpush.msra.mxu0 %v54
    %112 = vmatpush.msra.mxu0 %v53
    %113 = vmatpush.msra.mxu0 %v52
    %114 = vmatpush.msra.mxu0 %v51
    %115 = vmatpush.msra.mxu0 %v50
    %116 = vmatpush.msra.mxu0 %v49
    %117 = vmatpush.msra.mxu0 %v48
    %118 = vmatpush.msra.mxu0 %v47
    %119 = vmatpush.msra.mxu0 %v46
    %120 = vmatpush.msra.mxu0 %v45
    %121 = vmatpush.msra.mxu0 %v44
    %122 = vmatpush.msra.mxu0 %v43
    %123 = vmatpush.msra.mxu0 %v42
    %124 = vmatpush.msra.mxu0 %v41
    %125 = vmatpush.msra.mxu0 %v40
    %126 = vmatpush.msra.mxu0 %v39
    %127 = vmatmul.f32.gmra.mxu0 %v20
    %v128 = vpop.f32.mrf.mxu0
    %v129 = vadd.f32 %v109, %v128
    %130 = vdwg.mxu0
    %131 = vmatpush.msra.mxu0 %v70
    %132 = vmatpush.msra.mxu0 %v69
    %133 = vmatpush.msra.mxu0 %v68
    %134 = vmatpush.msra.mxu0 %v67
    %135 = vmatpush.msra.mxu0 %v66
    %136 = vmatpush.msra.mxu0 %v65
    %137 = vmatpush.msra.mxu0 %v64
    %138 = vmatpush.msra.mxu0 %v63
    %139 = vmatpush.msra.mxu0 %v62
    %140 = vmatpush.msra.mxu0 %v61
    %141 = vmatpush.msra.mxu0 %v60
    %142 = vmatpush.msra.mxu0 %v59
    %143 = vmatpush.msra.mxu0 %v58
    %144 = vmatpush.msra.mxu0 %v57
    %145 = vmatpush.msra.mxu0 %v56
    %146 = vmatpush.msra.mxu0 %v55
    %147 = vmatmul.f32.gmra.mxu0 %v21
    %v148 = vpop.f32.mrf.mxu0
    %v149 = vadd.f32 %v129, %v148
    %150 = vdwg.mxu0
    %151 = vmatpush.msra.mxu0 %v86
    %152 = vmatpush.msra.mxu0 %v85
    %153 = vmatpush.msra.mxu0 %v84
    %154 = vmatpush.msra.mxu0 %v83
    %155 = vmatpush.msra.mxu0 %v82
    %156 = vmatpush.msra.mxu0 %v81
    %157 = vmatpush.msra.mxu0 %v80
    %158 = vmatpush.msra.mxu0 %v79
    %159 = vmatpush.msra.mxu0 %v78
    %160 = vmatpush.msra.mxu0 %v77
    %161 = vmatpush.msra.mxu0 %v76
    %162 = vmatpush.msra.mxu0 %v75
    %163 = vmatpush.msra.mxu0 %v74
    %164 = vmatpush.msra.mxu0 %v73
    %165 = vmatpush.msra.mxu0 %v72
    %166 = vmatpush.msra.mxu0 %v71
    %167 = vmatmul.f32.gmra.mxu0 %v22
    %v168 = vpop.f32.mrf.mxu0
    %v169 = vadd.f32 %v149, %v168
    %170 = vdwg.mxu0
    %171 = vst [vmem:[#allocation2] sm:$0xff] %v169
    // Predicated region
    $region14: #{classifier_forward.1} parent=1 // pred_check
      _
    $region15: #{classifier_forward.1} parent=1 // pred_check_branch
      %173 = sbr.rel (0) target = $region17
    $region16: #{classifier_forward.1} parent=1 // pred_region
      %175 = vsyncadd [#allocation3], 0
      %s177 = sshll.u32 [#allocation2], 4
      %s178 = int_to_ptr.vmem [resolvable:$true] %s177
      %s179 = sshll.u32 %s3, 4
      %s180 = int_to_ptr.hbm [resolvable:$true] %s179
      %182 = dma.vmem_to_hbm [thread:$0]  %s178, 128, %s180, [#allocation3]
    $region17: #{classifier_forward.1} parent=1 // pred_fallthru
      _
    // Predicated region
    $region18: #{classifier_forward.1} parent=1 // pred_check
      _
    $region19: #{classifier_forward.1} parent=1 // pred_check_branch
      %184 = sbr.rel (0) target = $region21
    $region20: #{classifier_forward.1} parent=1 // pred_region
      %186 = dma.done [#allocation3], 128
    $region21: #{classifier_forward.1} parent=1 // pred_fallthru
      _
    %187 = vsyncpa [#allocation3], 1

</llo_original>
